<compile_context>
chip_gen: v6e
topology: v6e:2x2x1
jax: 0.10.0
libtpu: 0.0.40
codegen_flags: <defaults>
</compile_context>

<pallas_src>
import functools
import math

import jax
import jax.numpy as jnp
from jax.experimental import pallas as pl
from jax.experimental.pallas import tpu as pltpu


def _pick_tile(n, target, multiple):
    """Largest divisor of n that is a multiple of `multiple` and <= target,
    preferring a split that yields >= 2 grid steps (v7x has 2 TensorCores)."""
    best = None
    for cand in range(multiple, min(target, n) + 1, multiple):
        if n % cand == 0:
            best = cand
    if best is None:
        return n
    if n // best < 2:
        for cand in range(best - multiple, 0, -multiple):
            if n % cand == 0 and n // cand >= 2:
                return cand
    return best


def _proj_kernel(xq_ref, xk_ref, xv_ref, wq_ref, wk_ref, wv_ref,
                 q_ref, k_ref, v_ref):
    # 1x1 conv (pointwise over channels) as a channels-major MXU matmul:
    # (C_out, C_in) @ (C_in, TILE_M).  Last dim of every block is TILE_M
    # (>=128 when M allows it) -> lane-dense loads and unmasked stores.
    q_ref[...] = jnp.dot(wq_ref[...], xq_ref[...],
                         preferred_element_type=jnp.float32).astype(q_ref.dtype)
    k_ref[...] = jnp.dot(wk_ref[...], xk_ref[...],
                         preferred_element_type=jnp.float32).astype(k_ref.dtype)
    v_ref[...] = jnp.dot(wv_ref[...], xv_ref[...],
                         preferred_element_type=jnp.float32).astype(v_ref.dtype)


def _attn_kernel(q_ref, k_ref, v_ref, o_ref, *, scale):
    # q/k/v blocks: (BH_TILE, T, Dh) -- a chunk of (batch, head) pairs per
    # grid step, amortizing the per-step pipeline overhead.
    q = q_ref[...].astype(jnp.float32)
    k = k_ref[...].astype(jnp.float32)
    v = v_ref[...].astype(jnp.float32)

    # scores = q @ k^T * scale, batched over the (batch, head) chunk.
    s = jnp.einsum('bqd,bkd->bqk', q, k,
                   preferred_element_type=jnp.float32) * scale      # (bh, T, T)

    # LowerTriangularMask (causal); built once per grid step, shared across
    # the whole (batch, head) chunk.
    t = q.shape[1]
    row = jax.lax.broadcasted_iota(jnp.int32, (t, t), 0)
    col = jax.lax.broadcasted_iota(jnp.int32, (t, t), 1)
    s = jnp.where((col <= row)[None, :, :], s, -1e30)

    # numerically-stable softmax along keys
    m = jnp.max(s, axis=-1, keepdims=True)
    p = jnp.exp(s - m)
    l = jnp.sum(p, axis=-1, keepdims=True)
    inv = pl.reciprocal(l, approx=True)          # EUP slot (nearly free)
    inv = inv * (2.0 - l * inv)                  # one Newton step -> f32-accurate

    ctx = jnp.einsum('bqk,bkd->bqd', p.astype(v.dtype), v,
                     preferred_element_type=jnp.float32)
    o_ref[...] = (ctx * inv).astype(o_ref.dtype)


def multi_head_attention(query, key, value, wq, wk, wv, num_heads):
    """query/key/value: (B, T, C, H, W) float32 -- same 5-D layout the PyTorch
    module consumes.  wq/wk/wv: (C_out, C_in) = conv_weight[:, :, 0, 0]."""
    B, T, C, H, W = query.shape
    assert C % num_heads == 0
    d_head = C // num_heads
    P = H * W
    Dh = d_head * P
    M = B * T * P

    # ---------------- projection: channels-major, tiled over M --------------
    # (B,T,C,H,W) -> (C, M) with columns ordered (b, t, y, x) row-major.
    def to_cm(x):
        return jnp.transpose(x, (2, 0, 1, 3, 4)).reshape(C, M)

    xq, xk, xv = to_cm(query), to_cm(key), to_cm(value)

    tile_m = _pick_tile(M, 512, 128)     # 128-multiple lane-dense tiles
    grid_m = M // tile_m
    x_spec = pl.BlockSpec((C, tile_m), lambda i: (0, i))
    w_spec = pl.BlockSpec((C, C), lambda i: (0, 0))      # weights resident

    qT, kT, vT = pl.pallas_call(
        _proj_kernel,
        out_shape=tuple(jax.ShapeDtypeStruct((C, M), query.dtype)
                        for _ in range(3)),
        grid=(grid_m,),
        in_specs=[x_spec, x_spec, x_spec, w_spec, w_spec, w_spec],
        out_specs=(x_spec, x_spec, x_spec),
        compiler_params=pltpu.CompilerParams(
            dimension_semantics=("parallel",),
            vmem_limit_bytes=64 * 1024 * 1024),   # fits v7x 64 MiB VMEM
    )(xq, xk, xv, wq, wk, wv)

    # (C, M) -> (B*num_heads, T, Dh), Dh flattened as [d_head, H, W] (spec order)
    def to_heads(xT):
        x = xT.reshape(num_heads, d_head, B, T, H, W)
        x = jnp.transpose(x, (2, 0, 3, 1, 4, 5))         # (B, h, T, d, H, W)
        return x.reshape(B * num_heads, T, Dh)

    qh, kh, vh = to_heads(qT), to_heads(kT), to_heads(vT)

    # ---------------- attention: coarsened (batch*head) grid -----------------
    BH = B * num_heads
    bh_tile = _pick_tile(BH, 8, 1)
    scale = 1.0 / math.sqrt(Dh)
    blk = pl.BlockSpec((bh_tile, T, Dh), lambda i: (i, 0, 0))

    ctx = pl.pallas_call(
        functools.partial(_attn_kernel, scale=scale),
        out_shape=jax.ShapeDtypeStruct((BH, T, Dh), query.dtype),
        grid=(BH // bh_tile,),
        in_specs=[blk, blk, blk],
        out_specs=blk,
        compiler_params=pltpu.CompilerParams(
            dimension_semantics=("parallel",),
            vmem_limit_bytes=64 * 1024 * 1024),
    )(qh, kh, vh)

    # (BH, T, Dh) -> (B, T, C, H, W), matching context.view(B, T, h*d_head, H, W)
    ctx = ctx.reshape(B, num_heads, T, d_head, H, W)
    ctx = jnp.transpose(ctx, (0, 2, 1, 3, 4, 5)).reshape(B, T, C, H, W)
    attn = None   # module returns attn=None
    return ctx, attn


def _reference(query, key, value, wq, wk, wv, num_heads):
    # Pure-JAX re-statement of the PyTorch forward for validation.
    B, T, C, H, W = query.shape
    d_head = C // num_heads
    Dh = d_head * H * W

    def proj(x, w):
        # 1x1 conv NCHW: out[..., o, y, x] = sum_c w[o, c] * x[..., c, y, x]
        return jnp.einsum('btchw,oc->btohw', x, w)

    def heads(x):
        return x.reshape(B, T, num_heads, d_head, H, W).reshape(
            B, T, num_heads, Dh)

    q = heads(proj(query, wq))
    k = heads(proj(key, wk))
    v = heads(proj(value, wv))

    s = jnp.einsum('bqhd,bkhd->bhqk', q, k) / math.sqrt(Dh)
    mask = jnp.tril(jnp.ones((T, T), dtype=bool))
    s = jnp.where(mask, s, -jnp.inf)
    p = jax.nn.softmax(s, axis=-1)
    ctx = jnp.einsum('bhqk,bkhd->bqhd', p, v)
    return ctx.reshape(B, T, C, H, W)


if __name__ == "__main__":
    B, T, C, H, W = 2, 8, 16, 4, 4      # d_model=16, num_heads=2, d_head=8, Dh=128
    num_heads = 2

    root = jax.random.PRNGKey(0)
    ks = jax.random.split(root, 6)
    q_in = jax.random.normal(ks[0], (B, T, C, H, W), jnp.float32)
    k_in = jax.random.normal(ks[1], (B, T, C, H, W), jnp.float32)
    v_in = jax.random.normal(ks[2], (B, T, C, H, W), jnp.float32)

    # deterministic synthetic 1x1-conv weights in native (C_out, C_in) layout
    w_scale = 1.0 / math.sqrt(C)
    wq = jax.random.normal(ks[3], (C, C), jnp.float32) * w_scale
    wk = jax.random.normal(ks[4], (C, C), jnp.float32) * w_scale
    wv = jax.random.normal(ks[5], (C, C), jnp.float32) * w_scale

    out, attn = multi_head_attention(q_in, k_in, v_in, wq, wk, wv, num_heads)
    out = jax.block_until_ready(out)

    assert out.shape == (B, T, C, H, W)
    assert attn is None
    ref = _reference(q_in, k_in, v_in, wq, wk, wv, num_heads)
    err = float(jnp.max(jnp.abs(out - ref)))
    # tolerance leaves margin for the (Newton-refined) EUP approx reciprocal
    assert err < 2e-4, f"max abs err {err}"
    print("KERNEL_OK")
</pallas_src>

<mosaic_0001>
module attributes {stable_mosaic.version = 11 : i64} {
  func.func @_proj_kernel(%arg0: i32, %arg1: memref<16x128xf32, #tpu.memory_space<vmem>>, %arg2: memref<16x128xf32, #tpu.memory_space<vmem>>, %arg3: memref<16x128xf32, #tpu.memory_space<vmem>>, %arg4: memref<16x16xf32, #tpu.memory_space<vmem>>, %arg5: memref<16x16xf32, #tpu.memory_space<vmem>>, %arg6: memref<16x16xf32, #tpu.memory_space<vmem>>, %arg7: memref<16x128xf32, #tpu.memory_space<vmem>>, %arg8: memref<16x128xf32, #tpu.memory_space<vmem>>, %arg9: memref<16x128xf32, #tpu.memory_space<vmem>>) attributes {dimension_semantics = [#tpu.dimension_semantics<parallel>], iteration_bounds = array<i64: 2>, scalar_prefetch = 0 : i64, scratch_operands = 0 : i64, tpu.core_type = #tpu.core_type<tc>, window_params = [{transform_indices = @transform_0, window_bounds = array<i64: 16, 128>}, {transform_indices = @transform_1, window_bounds = array<i64: 16, 128>}, {transform_indices = @transform_2, window_bounds = array<i64: 16, 128>}, {pipeline_mode = #tpu.pipeline_mode<synchronous>, transform_indices = @transform_3, window_bounds = array<i64: 16, 16>}, {pipeline_mode = #tpu.pipeline_mode<synchronous>, transform_indices = @transform_4, window_bounds = array<i64: 16, 16>}, {pipeline_mode = #tpu.pipeline_mode<synchronous>, transform_indices = @transform_5, window_bounds = array<i64: 16, 16>}, {transform_indices = @transform_6, window_bounds = array<i64: 16, 128>}, {transform_indices = @transform_7, window_bounds = array<i64: 16, 128>}, {transform_indices = @transform_8, window_bounds = array<i64: 16, 128>}]} {
    %c0 = arith.constant 0 : index
    %c0_0 = arith.constant 0 : index
    %0 = vector.load %arg4[%c0, %c0_0] : memref<16x16xf32, #tpu.memory_space<vmem>>, vector<16x16xf32>
    %c0_1 = arith.constant 0 : index
    %c0_2 = arith.constant 0 : index
    %1 = vector.load %arg1[%c0_1, %c0_2] : memref<16x128xf32, #tpu.memory_space<vmem>>, vector<16x128xf32>
    %cst = arith.constant dense<0.000000e+00> : vector<16x128xf32>
    %2 = tpu.matmul %0, %1, %cst {dimension_numbers = #tpu.dot_dimension_numbers<[1], [0], [0], [1], [0, 0, 1, 1], [], []>} : vector<16x16xf32>, vector<16x128xf32>, vector<16x128xf32> -> vector<16x128xf32>
    %c0_3 = arith.constant 0 : index
    %c0_4 = arith.constant 0 : index
    %3 = vector.load %arg7[%c0_3, %c0_4] : memref<16x128xf32, #tpu.memory_space<vmem>>, vector<16x128xf32>
    tpu.vector_store %arg7[%c0_3, %c0_4], %2 {strides = array<i32>} : memref<16x128xf32, #tpu.memory_space<vmem>>, vector<16x128xf32>,
    %c0_5 = arith.constant 0 : index
    %c0_6 = arith.constant 0 : index
    %4 = vector.load %arg5[%c0_5, %c0_6] : memref<16x16xf32, #tpu.memory_space<vmem>>, vector<16x16xf32>
    %c0_7 = arith.constant 0 : index
    %c0_8 = arith.constant 0 : index
    %5 = vector.load %arg2[%c0_7, %c0_8] : memref<16x128xf32, #tpu.memory_space<vmem>>, vector<16x128xf32>
    %cst_9 = arith.constant dense<0.000000e+00> : vector<16x128xf32>
    %6 = tpu.matmul %4, %5, %cst_9 {dimension_numbers = #tpu.dot_dimension_numbers<[1], [0], [0], [1], [0, 0, 1, 1], [], []>} : vector<16x16xf32>, vector<16x128xf32>, vector<16x128xf32> -> vector<16x128xf32>
    %c0_10 = arith.constant 0 : index
    %c0_11 = arith.constant 0 : index
    %7 = vector.load %arg8[%c0_10, %c0_11] : memref<16x128xf32, #tpu.memory_space<vmem>>, vector<16x128xf32>
    tpu.vector_store %arg8[%c0_10, %c0_11], %6 {strides = array<i32>} : memref<16x128xf32, #tpu.memory_space<vmem>>, vector<16x128xf32>,
    %c0_12 = arith.constant 0 : index
    %c0_13 = arith.constant 0 : index
    %8 = vector.load %arg6[%c0_12, %c0_13] : memref<16x16xf32, #tpu.memory_space<vmem>>, vector<16x16xf32>
    %c0_14 = arith.constant 0 : index
    %c0_15 = arith.constant 0 : index
    %9 = vector.load %arg3[%c0_14, %c0_15] : memref<16x128xf32, #tpu.memory_space<vmem>>, vector<16x128xf32>
    %cst_16 = arith.constant dense<0.000000e+00> : vector<16x128xf32>
    %10 = tpu.matmul %8, %9, %cst_16 {dimension_numbers = #tpu.dot_dimension_numbers<[1], [0], [0], [1], [0, 0, 1, 1], [], []>} : vector<16x16xf32>, vector<16x128xf32>, vector<16x128xf32> -> vector<16x128xf32>
    %c0_17 = arith.constant 0 : index
    %c0_18 = arith.constant 0 : index
    %11 = vector.load %arg9[%c0_17, %c0_18] : memref<16x128xf32, #tpu.memory_space<vmem>>, vector<16x128xf32>
    tpu.vector_store %arg9[%c0_17, %c0_18], %10 {strides = array<i32>} : memref<16x128xf32, #tpu.memory_space<vmem>>, vector<16x128xf32>,
    return
  }
  func.func @transform_0(%arg0: i32) -> (i32, i32) {
    %c0_i32 = arith.constant 0 : i32
    %c0_i32_0 = arith.constant 0 : i32
    return %c0_i32, %arg0 : i32, i32
  }
  func.func @transform_1(%arg0: i32) -> (i32, i32) {
    %c0_i32 = arith.constant 0 : i32
    %c0_i32_0 = arith.constant 0 : i32
    return %c0_i32, %arg0 : i32, i32
  }
  func.func @transform_2(%arg0: i32) -> (i32, i32) {
    %c0_i32 = arith.constant 0 : i32
    %c0_i32_0 = arith.constant 0 : i32
    return %c0_i32, %arg0 : i32, i32
  }
  func.func @transform_3(%arg0: i32) -> (i32, i32) {
    %c0_i32 = arith.constant 0 : i32
    %c0_i32_0 = arith.constant 0 : i32
    %c0_i32_1 = arith.constant 0 : i32
    return %c0_i32, %c0_i32_0 : i32, i32
  }
  func.func @transform_4(%arg0: i32) -> (i32, i32) {
    %c0_i32 = arith.constant 0 : i32
    %c0_i32_0 = arith.constant 0 : i32
    %c0_i32_1 = arith.constant 0 : i32
    return %c0_i32, %c0_i32_0 : i32, i32
  }
  func.func @transform_5(%arg0: i32) -> (i32, i32) {
    %c0_i32 = arith.constant 0 : i32
    %c0_i32_0 = arith.constant 0 : i32
    %c0_i32_1 = arith.constant 0 : i32
    return %c0_i32, %c0_i32_0 : i32, i32
  }
  func.func @transform_6(%arg0: i32) -> (i32, i32) {
    %c0_i32 = arith.constant 0 : i32
    %c0_i32_0 = arith.constant 0 : i32
    return %c0_i32, %arg0 : i32, i32
  }
  func.func @transform_7(%arg0: i32) -> (i32, i32) {
    %c0_i32 = arith.constant 0 : i32
    %c0_i32_0 = arith.constant 0 : i32
    return %c0_i32, %arg0 : i32, i32
  }
  func.func @transform_8(%arg0: i32) -> (i32, i32) {
    %c0_i32 = arith.constant 0 : i32
    %c0_i32_0 = arith.constant 0 : i32
    return %c0_i32, %arg0 : i32, i32
  }
}

</mosaic_0001>

<llo_original>
// kernel: tpu_custom_call.1
$region0: #{tpu_custom_call.1}
  #allocation0 [shape = 'u32[]', space=smem, size = 0x4, offset = 0x4, fixed_abs, tag = 'smem constant byte address 0x4 - core index']
  #allocation1 [shape = 'u32[144,128]{1,0:T(1,128)}', space=vmem, size = 0x12000, scoped, tag = 'internal scratch']
  %s0 = inlined_call_operand.hbm [shape: f32[16,256], index: 0, kind: input, shape index: {}]
  %s1 = inlined_call_operand.hbm [shape: f32[16,256], index: 1, kind: input, shape index: {}]
  %s2 = inlined_call_operand.hbm [shape: f32[16,256], index: 2, kind: input, shape index: {}]
  %s3 = inlined_call_operand.hbm [shape: f32[16,16], index: 3, kind: input, shape index: {}]
  %s4 = inlined_call_operand.hbm [shape: f32[16,16], index: 4, kind: input, shape index: {}]
  %s5 = inlined_call_operand.hbm [shape: f32[16,16], index: 5, kind: input, shape index: {}]
  %s6 = inlined_call_operand.hbm [shape: f32[16,256], index: 6, kind: output, shape index: {0}]
  %s7 = inlined_call_operand.hbm [shape: f32[16,256], index: 7, kind: output, shape index: {1}]
  %s8 = inlined_call_operand.hbm [shape: f32[16,256], index: 8, kind: output, shape index: {2}]
  %9 = xla_tuple %s6, %s7, %s8
  %s10 = sld [smem:[#allocation0]]
  $region97: #{tpu_custom_call.1} parent=0
    _
  %s12 = ssub.s32 1, %s10
  %s13 = scalar_select 0, %s12, %s10
  $region1: #{tpu_custom_call.1} parent=0
    #allocation2 [shape = 'u8[16384]{0}', space=vmem, size = 0x4000, scoped, tag = 'input window, operand 0']
    #allocation3 [shape = 's32[2]{0}', space=sflag, size = 0x8, scoped, tag = 'scoped memory for tpu_custom_call.1']
    #allocation4 [shape = 's32[2]{0}', space=sflag, size = 0x8, scoped, tag = 'scoped memory for tpu_custom_call.1']
    #allocation5 [shape = 'u8[16384]{0}', space=vmem, size = 0x4000, scoped, tag = 'input window, operand 1']
    #allocation6 [shape = 's32[2]{0}', space=sflag, size = 0x8, scoped, tag = 'scoped memory for tpu_custom_call.1']
    #allocation7 [shape = 'u8[16384]{0}', space=vmem, size = 0x4000, scoped, tag = 'input window, operand 2']
    #allocation8 [shape = 'u8[8192]{0}', space=vmem, size = 0x2000, scoped, tag = 'input window, operand 3, single buffered']
    #allocation9 [shape = 's32[1]{0}', space=sflag, size = 0x4, scoped, tag = 'scoped memory for tpu_custom_call.1']
    #allocation10 [shape = 'u8[8192]{0}', space=vmem, size = 0x2000, scoped, tag = 'input window, operand 4, single buffered']
    #allocation11 [shape = 'u8[8192]{0}', space=vmem, size = 0x2000, scoped, tag = 'input window, operand 5, single buffered']
    #allocation12 [shape = 's32[1]{0}', space=sflag, size = 0x4, scoped, tag = 'scoped memory for tpu_custom_call.1']
    #allocation13 [shape = 'u8[16384]{0}', space=vmem, size = 0x4000, scoped, tag = 'output window, operand 0']
    #allocation14 [shape = 'u8[16384]{0}', space=vmem, size = 0x4000, scoped, tag = 'output window, operand 1']
    #allocation15 [shape = 's32[2]{0}', space=sflag, size = 0x8, scoped, tag = 'scoped memory for tpu_custom_call.1']
    #allocation16 [shape = 'u8[16384]{0}', space=vmem, size = 0x4000, scoped, tag = 'output window, operand 2']
    %14 = vsyncpa [#allocation3], 0
    %s15 = scalar_lea.sflag [#allocation3], 1
    %16 = vsyncpa %s15, 0
    %17 = vsyncpa [#allocation6], 0
    %s18 = scalar_lea.sflag [#allocation6], 1
    %19 = vsyncpa %s18, 0
    %20 = vsyncpa [#allocation9], 0
    %21 = vsyncpa [#allocation12], 0
    %22 = vsyncpa [#allocation4], 0
    %s23 = scalar_lea.sflag [#allocation4], 1
    %24 = vsyncpa %s23, 0
    %25 = vsyncpa [#allocation15], 0
    %s26 = scalar_lea.sflag [#allocation15], 1
    %27 = vsyncpa %s26, 0
    loop: start=0, step=1, limit=4
    $region2: #{tpu_custom_call.1} parent=1 // loop_pre_header
      _
    $region3: #{tpu_custom_call.1} parent=1 // loop_header
      %s29 = sphi 0, %s33
      %p30 = scmp.ge.s32.totalorder %s29, 4
      %s39 = sphi 0, %s41
      %s42 = sphi 0, %s39
      %s43 = sphi 0, %s42
      %s59 = sphi 0, %s43
      %s65 = sphi 0, %s67
      %s68 = sphi 0, %s65
      %s69 = sphi 0, %s68
      %s85 = sphi 0, %s69
      %s91 = sphi 0, %s93
      %s94 = sphi 0, %s91
      %s95 = sphi 0, %s94
      %s111 = sphi 0, %s95
      %s115 = sphi 0, %s115
      %s117 = sphi 0, %s115
      %s118 = sphi 0, %s117
      %s132 = sphi 0, %s118
      %s136 = sphi 0, %s136
      %s138 = sphi 0, %s136
      %s139 = sphi 0, %s138
      %s153 = sphi 0, %s139
      %s157 = sphi 0, %s157
      %s159 = sphi 0, %s157
      %s160 = sphi 0, %s159
      %s174 = sphi 0, %s160
      %s180 = sphi 0, %s182
      %s183 = sphi 0, %s180
      %s184 = sphi 0, %s183
      %s200 = sphi 0, %s184
      %s206 = sphi 0, %s208
      %s209 = sphi 0, %s206
      %s210 = sphi 0, %s209
      %s226 = sphi 0, %s210
      %s232 = sphi 0, %s234
      %s235 = sphi 0, %s232
      %s236 = sphi 0, %s235
      %s252 = sphi 0, %s236
    $region4: #{tpu_custom_call.1} parent=1 // loop_header_branch
      %32 = sbr.rel (%p30) target = $region8
    $region5: #{tpu_custom_call.1} parent=1 // loop_body
      %s34 = ssub.s32 %s29, 1
      %s35 = ssub.s32 %s29, 2
      %s36 = sadd.s32 %s29, 1
      %s37 = ssub.s32 %s29, %s36
      %p38 = scmp.eq.s32.totalorder %s37, 0
      %s40 = sadd.s32 %s39, 1
      %s41 = scalar_select %p38, %s39, %s40
      %p44 = pneg %p38
      %p45 = scmp.eq.s32.totalorder %s29, 1
      %p46 = por %p44, %p45
      %p47 = scmp.ne.s32.totalorder %s39, %s42
      %p48 = scmp.eq.s32.totalorder %s29, 0
      %p49 = por %p47, %p48
      %p50 = scmp.ne.s32.totalorder %s39, %s42
      %p51 = scmp.eq.s32.totalorder %s34, 1
      %p52 = por %p50, %p51
      %p53 = scmp.ne.s32.totalorder %s42, %s43
      %p54 = scmp.eq.s32.totalorder %s34, 0
      %p55 = por %p53, %p54
      %p56 = scmp.ne.s32.totalorder %s42, %s43
      %p57 = scmp.eq.s32.totalorder %s35, 1
      %p58 = por %p56, %p57
      %p60 = scmp.ne.s32.totalorder %s43, %s59
      %p61 = scmp.eq.s32.totalorder %s35, 0
      %p62 = por %p60, %p61
      %s63 = ssub.s32 %s29, %s36
      %p64 = scmp.eq.s32.totalorder %s63, 0
      %s66 = sadd.s32 %s65, 1
      %s67 = scalar_select %p64, %s65, %s66
      %p70 = pneg %p64
      %p71 = scmp.eq.s32.totalorder %s29, 1
      %p72 = por %p70, %p71
      %p73 = scmp.ne.s32.totalorder %s65, %s68
      %p74 = scmp.eq.s32.totalorder %s29, 0
      %p75 = por %p73, %p74
      %p76 = scmp.ne.s32.totalorder %s65, %s68
      %p77 = scmp.eq.s32.totalorder %s34, 1
      %p78 = por %p76, %p77
      %p79 = scmp.ne.s32.totalorder %s68, %s69
      %p80 = scmp.eq.s32.totalorder %s34, 0
      %p81 = por %p79, %p80
      %p82 = scmp.ne.s32.totalorder %s68, %s69
      %p83 = scmp.eq.s32.totalorder %s35, 1
      %p84 = por %p82, %p83
      %p86 = scmp.ne.s32.totalorder %s69, %s85
      %p87 = scmp.eq.s32.totalorder %s35, 0
      %p88 = por %p86, %p87
      %s89 = ssub.s32 %s29, %s36
      %p90 = scmp.eq.s32.totalorder %s89, 0
      %s92 = sadd.s32 %s91, 1
      %s93 = scalar_select %p90, %s91, %s92
      %p96 = pneg %p90
      %p97 = scmp.eq.s32.totalorder %s29, 1
      %p98 = por %p96, %p97
      %p99 = scmp.ne.s32.totalorder %s91, %s94
      %p100 = scmp.eq.s32.totalorder %s29, 0
      %p101 = por %p99, %p100
      %p102 = scmp.ne.s32.totalorder %s91, %s94
      %p103 = scmp.eq.s32.totalorder %s34, 1
      %p104 = por %p102, %p103
      %p105 = scmp.ne.s32.totalorder %s94, %s95
      %p106 = scmp.eq.s32.totalorder %s34, 0
      %p107 = por %p105, %p106
      %p108 = scmp.ne.s32.totalorder %s94, %s95
      %p109 = scmp.eq.s32.totalorder %s35, 1
      %p110 = por %p108, %p109
      %p112 = scmp.ne.s32.totalorder %s95, %s111
      %p113 = scmp.eq.s32.totalorder %s35, 0
      %p114 = por %p112, %p113
      %s116 = sadd.s32 %s115, 1
      %p119 = scmp.eq.s32.totalorder %s29, 1
      %p120 = scmp.ne.s32.totalorder %s115, %s117
      %p121 = scmp.eq.s32.totalorder %s29, 0
      %p122 = por %p120, %p121
      %p123 = scmp.ne.s32.totalorder %s115, %s117
      %p124 = scmp.eq.s32.totalorder %s34, 1
      %p125 = por %p123, %p124
      %p126 = scmp.ne.s32.totalorder %s117, %s118
      %p127 = scmp.eq.s32.totalorder %s34, 0
      %p128 = por %p126, %p127
      %p129 = scmp.ne.s32.totalorder %s117, %s118
      %p130 = scmp.eq.s32.totalorder %s35, 1
      %p131 = por %p129, %p130
      %p133 = scmp.ne.s32.totalorder %s118, %s132
      %p134 = scmp.eq.s32.totalorder %s35, 0
      %p135 = por %p133, %p134
      %s137 = sadd.s32 %s136, 1
      %p140 = scmp.eq.s32.totalorder %s29, 1
      %p141 = scmp.ne.s32.totalorder %s136, %s138
      %p142 = scmp.eq.s32.totalorder %s29, 0
      %p143 = por %p141, %p142
      %p144 = scmp.ne.s32.totalorder %s136, %s138
      %p145 = scmp.eq.s32.totalorder %s34, 1
      %p146 = por %p144, %p145
      %p147 = scmp.ne.s32.totalorder %s138, %s139
      %p148 = scmp.eq.s32.totalorder %s34, 0
      %p149 = por %p147, %p148
      %p150 = scmp.ne.s32.totalorder %s138, %s139
      %p151 = scmp.eq.s32.totalorder %s35, 1
      %p152 = por %p150, %p151
      %p154 = scmp.ne.s32.totalorder %s139, %s153
      %p155 = scmp.eq.s32.totalorder %s35, 0
      %p156 = por %p154, %p155
      %s158 = sadd.s32 %s157, 1
      %p161 = scmp.eq.s32.totalorder %s29, 1
      %p162 = scmp.ne.s32.totalorder %s157, %s159
      %p163 = scmp.eq.s32.totalorder %s29, 0
      %p164 = por %p162, %p163
      %p165 = scmp.ne.s32.totalorder %s157, %s159
      %p166 = scmp.eq.s32.totalorder %s34, 1
      %p167 = por %p165, %p166
      %p168 = scmp.ne.s32.totalorder %s159, %s160
      %p169 = scmp.eq.s32.totalorder %s34, 0
      %p170 = por %p168, %p169
      %p171 = scmp.ne.s32.totalorder %s159, %s160
      %p172 = scmp.eq.s32.totalorder %s35, 1
      %p173 = por %p171, %p172
      %p175 = scmp.ne.s32.totalorder %s160, %s174
      %p176 = scmp.eq.s32.totalorder %s35, 0
      %p177 = por %p175, %p176
      %s178 = ssub.s32 %s29, %s36
      %p179 = scmp.eq.s32.totalorder %s178, 0
      %s181 = sadd.s32 %s180, 1
      %s182 = scalar_select %p179, %s180, %s181
      %p185 = pneg %p179
      %p186 = scmp.eq.s32.totalorder %s29, 1
      %p187 = por %p185, %p186
      %p188 = scmp.ne.s32.totalorder %s180, %s183
      %p189 = scmp.eq.s32.totalorder %s29, 0
      %p190 = por %p188, %p189
      %p191 = scmp.ne.s32.totalorder %s180, %s183
      %p192 = scmp.eq.s32.totalorder %s34, 1
      %p193 = por %p191, %p192
      %p194 = scmp.ne.s32.totalorder %s183, %s184
      %p195 = scmp.eq.s32.totalorder %s34, 0
      %p196 = por %p194, %p195
      %p197 = scmp.ne.s32.totalorder %s183, %s184
      %p198 = scmp.eq.s32.totalorder %s35, 1
      %p199 = por %p197, %p198
      %p201 = scmp.ne.s32.totalorder %s184, %s200
      %p202 = scmp.eq.s32.totalorder %s35, 0
      %p203 = por %p201, %p202
      %s204 = ssub.s32 %s29, %s36
      %p205 = scmp.eq.s32.totalorder %s204, 0
      %s207 = sadd.s32 %s206, 1
      %s208 = scalar_select %p205, %s206, %s207
      %p211 = pneg %p205
      %p212 = scmp.eq.s32.totalorder %s29, 1
      %p213 = por %p211, %p212
      %p214 = scmp.ne.s32.totalorder %s206, %s209
      %p215 = scmp.eq.s32.totalorder %s29, 0
      %p216 = por %p214, %p215
      %p217 = scmp.ne.s32.totalorder %s206, %s209
      %p218 = scmp.eq.s32.totalorder %s34, 1
      %p219 = por %p217, %p218
      %p220 = scmp.ne.s32.totalorder %s209, %s210
      %p221 = scmp.eq.s32.totalorder %s34, 0
      %p222 = por %p220, %p221
      %p223 = scmp.ne.s32.totalorder %s209, %s210
      %p224 = scmp.eq.s32.totalorder %s35, 1
      %p225 = por %p223, %p224
      %p227 = scmp.ne.s32.totalorder %s210, %s226
      %p228 = scmp.eq.s32.totalorder %s35, 0
      %p229 = por %p227, %p228
      %s230 = ssub.s32 %s29, %s36
      %p231 = scmp.eq.s32.totalorder %s230, 0
      %s233 = sadd.s32 %s232, 1
      %s234 = scalar_select %p231, %s232, %s233
      %p237 = pneg %p231
      %p238 = scmp.eq.s32.totalorder %s29, 1
      %p239 = por %p237, %p238
      %p240 = scmp.ne.s32.totalorder %s232, %s235
      %p241 = scmp.eq.s32.totalorder %s29, 0
      %p242 = por %p240, %p241
      %p243 = scmp.ne.s32.totalorder %s232, %s235
      %p244 = scmp.eq.s32.totalorder %s34, 1
      %p245 = por %p243, %p244
      %p246 = scmp.ne.s32.totalorder %s235, %s236
      %p247 = scmp.eq.s32.totalorder %s34, 0
      %p248 = por %p246, %p247
      %p249 = scmp.ne.s32.totalorder %s235, %s236
      %p250 = scmp.eq.s32.totalorder %s35, 1
      %p251 = por %p249, %p250
      %p253 = scmp.ne.s32.totalorder %s236, %s252
      %p254 = scmp.eq.s32.totalorder %s35, 0
      %p255 = por %p253, %p254
      %p256 = scmp.le.s32.totalorder 1, %s29
      %p257 = scmp.lt.s32.totalorder %s29, 3
      %p258 = pnand %p256, %p257
      %p259 = pneg %p258
      // Predicated region
      $region9: #{tpu_custom_call.1} parent=5 // pred_check
        _
      $region10: #{tpu_custom_call.1} parent=5 // pred_check_branch
        %261 = sbr.rel (%p258) target = $region12
      $region11: #{tpu_custom_call.1} parent=5 // pred_region
        %s262 = ssub.s32 %s29, 1
        // Predicated region
        $region13: #{tpu_custom_call.1} parent=11 // pred_check
          %p263 = pneg %p128
        $region14: #{tpu_custom_call.1} parent=11 // pred_check_branch
          %265 = sbr.rel (%p263) target = $region16
        $region15: #{tpu_custom_call.1} parent=11 // pred_region
          %s267 = ssub.s32 256, 256
          %268 = vsyncadd [#allocation9], %s267
          %s269 = sshll.u32 [#allocation8], 4
          %s270 = int_to_ptr.vmem [resolvable:$true] %s269
          %275 = dma.hbm_to_vmem [thread:$0]  %s3, 256, %s270, [#allocation9], 128, 128, 8
        $region16: #{tpu_custom_call.1} parent=11 // pred_fallthru
          _
        // Predicated region
        $region17: #{tpu_custom_call.1} parent=11 // pred_check
          %p276 = pneg %p149
        $region18: #{tpu_custom_call.1} parent=11 // pred_check_branch
          %278 = sbr.rel (%p276) target = $region20
        $region19: #{tpu_custom_call.1} parent=11 // pred_region
          %s280 = ssub.s32 256, 256
          %281 = vsyncadd [#allocation9], %s280
          %s282 = sshll.u32 [#allocation10], 4
          %s283 = int_to_ptr.vmem [resolvable:$true] %s282
          %288 = dma.hbm_to_vmem [thread:$0]  %s4, 256, %s283, [#allocation9], 128, 128, 8
        $region20: #{tpu_custom_call.1} parent=11 // pred_fallthru
          _
        // Predicated region
        $region21: #{tpu_custom_call.1} parent=11 // pred_check
          %p289 = pneg %p170
        $region22: #{tpu_custom_call.1} parent=11 // pred_check_branch
          %291 = sbr.rel (%p289) target = $region24
        $region23: #{tpu_custom_call.1} parent=11 // pred_region
          %s293 = ssub.s32 256, 256
          %294 = vsyncadd [#allocation12], %s293
          %s295 = sshll.u32 [#allocation11], 4
          %s296 = int_to_ptr.vmem [resolvable:$true] %s295
          %301 = dma.hbm_to_vmem [thread:$0]  %s5, 256, %s296, [#allocation12], 128, 128, 8
        $region24: #{tpu_custom_call.1} parent=11 // pred_fallthru
          _
      $region12: #{tpu_custom_call.1} parent=5 // pred_fallthru
        _
      %p302 = scmp.lt.s32.totalorder %s29, 2
      // Predicated region
      $region25: #{tpu_custom_call.1} parent=5 // pred_check
        %p303 = pneg %p302
      $region26: #{tpu_custom_call.1} parent=5 // pred_check_branch
        %305 = sbr.rel (%p303) target = $region28
      $region27: #{tpu_custom_call.1} parent=5 // pred_region
        // Predicated region
        $region29: #{tpu_custom_call.1} parent=27 // pred_check
          %p306 = pneg %p49
        $region30: #{tpu_custom_call.1} parent=27 // pred_check_branch
          %308 = sbr.rel (%p306) target = $region32
        $region31: #{tpu_custom_call.1} parent=27 // pred_region
          %s309 = sand.u32 %s39, 1
          %s310 = scalar_lea.sflag [#allocation3], %s309
          %s311 = sand.u32 %s39, 1
          %s312 = smul.addr %s311, 16
          %s313 = scalar_lea.vmem [#allocation2], %s312
          %s315 = ssub.s32 256, 256
          %316 = vsyncadd %s310, %s315
          %s317 = smul.addr %s29, 128
          %s318 = scalar_lea.hbm %s0, %s317
          %s319 = sshll.u32 %s313, 4
          %s320 = int_to_ptr.vmem [resolvable:$true] %s319
          %325 = dma.hbm_to_vmem [thread:$0]  %s318, 256, %s320, %s310, 256, 128, 8
        $region32: #{tpu_custom_call.1} parent=27 // pred_fallthru
          _
        // Predicated region
        $region33: #{tpu_custom_call.1} parent=27 // pred_check
          %p326 = pneg %p75
        $region34: #{tpu_custom_call.1} parent=27 // pred_check_branch
          %328 = sbr.rel (%p326) target = $region36
        $region35: #{tpu_custom_call.1} parent=27 // pred_region
          %s329 = sand.u32 %s29, 1
          %s330 = scalar_lea.sflag [#allocation6], %s329
          %s331 = sand.u32 %s65, 1
          %s332 = smul.addr %s331, 16
          %s333 = scalar_lea.vmem [#allocation5], %s332
          %s335 = ssub.s32 256, 256
          %336 = vsyncadd %s330, %s335
          %s337 = smul.addr %s29, 128
          %s338 = scalar_lea.hbm %s1, %s337
          %s339 = sshll.u32 %s333, 4
          %s340 = int_to_ptr.vmem [resolvable:$true] %s339
          %345 = dma.hbm_to_vmem [thread:$0]  %s338, 256, %s340, %s330, 256, 128, 8
        $region36: #{tpu_custom_call.1} parent=27 // pred_fallthru
          _
        // Predicated region
        $region37: #{tpu_custom_call.1} parent=27 // pred_check
          %p346 = pneg %p101
        $region38: #{tpu_custom_call.1} parent=27 // pred_check_branch
          %348 = sbr.rel (%p346) target = $region40
        $region39: #{tpu_custom_call.1} parent=27 // pred_region
          %s349 = sand.u32 %s29, 1
          %s350 = scalar_lea.sflag [#allocation6], %s349
          %s351 = sand.u32 %s91, 1
          %s352 = smul.addr %s351, 16
          %s353 = scalar_lea.vmem [#allocation7], %s352
          %s355 = ssub.s32 256, 256
          %356 = vsyncadd %s350, %s355
          %s357 = smul.addr %s29, 128
          %s358 = scalar_lea.hbm %s2, %s357
          %s359 = sshll.u32 %s353, 4
          %s360 = int_to_ptr.vmem [resolvable:$true] %s359
          %365 = dma.hbm_to_vmem [thread:$0]  %s358, 256, %s360, %s350, 256, 128, 8
        $region40: #{tpu_custom_call.1} parent=27 // pred_fallthru
          _
      $region28: #{tpu_custom_call.1} parent=5 // pred_fallthru
        _
      %p366 = scmp.le.s32.totalorder 1, %s29
      %p367 = scmp.lt.s32.totalorder %s29, 3
      %p368 = pnand %p366, %p367
      %p369 = pneg %p368
      // Predicated region
      $region41: #{tpu_custom_call.1} parent=5 // pred_check
        _
      $region42: #{tpu_custom_call.1} parent=5 // pred_check_branch
        %371 = sbr.rel (%p368) target = $region44
      $region43: #{tpu_custom_call.1} parent=5 // pred_region
        %s372 = ssub.s32 %s29, 1
        %s373 = sand.u32 %s42, 1
        %s374 = scalar_lea.sflag [#allocation3], %s373
        %s375 = sand.u32 %s42, 1
        %s376 = smul.addr %s375, 16
        %s377 = scalar_lea.vmem [#allocation2], %s376
        // Predicated region
        $region45: #{tpu_custom_call.1} parent=43 // pred_check
          %p378 = pneg %p55
        $region46: #{tpu_custom_call.1} parent=43 // pred_check_branch
          %380 = sbr.rel (%p378) target = $region48
        $region47: #{tpu_custom_call.1} parent=43 // pred_region
          %381 = dma.done %s374, 256
        $region48: #{tpu_custom_call.1} parent=43 // pred_fallthru
          _
        %s382 = sand.u32 %s34, 1
        %s383 = scalar_lea.sflag [#allocation6], %s382
        %s384 = sand.u32 %s68, 1
        %s385 = smul.addr %s384, 16
        %s386 = scalar_lea.vmem [#allocation5], %s385
        // Predicated region
        $region49: #{tpu_custom_call.1} parent=43 // pred_check
          %p387 = pneg %p81
        $region50: #{tpu_custom_call.1} parent=43 // pred_check_branch
          %389 = sbr.rel (%p387) target = $region52
        $region51: #{tpu_custom_call.1} parent=43 // pred_region
          %390 = dma.done %s383, 256
        $region52: #{tpu_custom_call.1} parent=43 // pred_fallthru
          _
        %s391 = sand.u32 %s34, 1
        %s392 = scalar_lea.sflag [#allocation6], %s391
        %s393 = sand.u32 %s94, 1
        %s394 = smul.addr %s393, 16
        %s395 = scalar_lea.vmem [#allocation7], %s394
        // Predicated region
        $region53: #{tpu_custom_call.1} parent=43 // pred_check
          %p396 = pneg %p107
        $region54: #{tpu_custom_call.1} parent=43 // pred_check_branch
          %398 = sbr.rel (%p396) target = $region56
        $region55: #{tpu_custom_call.1} parent=43 // pred_region
          %399 = dma.done %s392, 256
        $region56: #{tpu_custom_call.1} parent=43 // pred_fallthru
          _
        // Predicated region
        $region57: #{tpu_custom_call.1} parent=43 // pred_check
          %p400 = pneg %p128
        $region58: #{tpu_custom_call.1} parent=43 // pred_check_branch
          %402 = sbr.rel (%p400) target = $region60
        $region59: #{tpu_custom_call.1} parent=43 // pred_region
          %403 = dma.done [#allocation9], 256
        $region60: #{tpu_custom_call.1} parent=43 // pred_fallthru
          _
        // Predicated region
        $region61: #{tpu_custom_call.1} parent=43 // pred_check
          %p404 = pneg %p149
        $region62: #{tpu_custom_call.1} parent=43 // pred_check_branch
          %406 = sbr.rel (%p404) target = $region64
        $region63: #{tpu_custom_call.1} parent=43 // pred_region
          %407 = dma.done [#allocation9], 256
        $region64: #{tpu_custom_call.1} parent=43 // pred_fallthru
          _
        // Predicated region
        $region65: #{tpu_custom_call.1} parent=43 // pred_check
          %p408 = pneg %p170
        $region66: #{tpu_custom_call.1} parent=43 // pred_check_branch
          %410 = sbr.rel (%p408) target = $region68
        $region67: #{tpu_custom_call.1} parent=43 // pred_region
          %411 = dma.done [#allocation12], 256
        $region68: #{tpu_custom_call.1} parent=43 // pred_fallthru
          _
        %s412 = sand.u32 %s42, 1
        %s413 = scalar_lea.sflag [#allocation3], %s412
        %s414 = sand.u32 %s42, 1
        %s415 = smul.addr %s414, 16
        %s416 = scalar_lea.vmem [#allocation2], %s415
        %p417 = pneg %p55
        %p418 = pneg %p52
        %s419 = sand.u32 %s34, 1
        %s420 = scalar_lea.sflag [#allocation6], %s419
        %s421 = sand.u32 %s68, 1
        %s422 = smul.addr %s421, 16
        %s423 = scalar_lea.vmem [#allocation5], %s422
        %p424 = pneg %p81
        %p425 = pneg %p78
        %s426 = sand.u32 %s34, 1
        %s427 = scalar_lea.sflag [#allocation6], %s426
        %s428 = sand.u32 %s94, 1
        %s429 = smul.addr %s428, 16
        %s430 = scalar_lea.vmem [#allocation7], %s429
        %p431 = pneg %p107
        %p432 = pneg %p104
        %p433 = pneg %p128
        %p434 = pneg %p125
        %p435 = pneg %p149
        %p436 = pneg %p146
        %p437 = pneg %p170
        %p438 = pneg %p167
        %p439 = pneg %p196
        %p440 = pneg %p193
        %s441 = sand.u32 %s183, 1
        %s442 = scalar_lea.sflag [#allocation4], %s441
        %s443 = sand.u32 %s183, 1
        %s444 = smul.addr %s443, 16
        %s445 = scalar_lea.vmem [#allocation13], %s444
        %p446 = pneg %p222
        %p447 = pneg %p219
        %s448 = sand.u32 %s34, 1
        %s449 = scalar_lea.sflag [#allocation15], %s448
        %s450 = sand.u32 %s209, 1
        %s451 = smul.addr %s450, 16
        %s452 = scalar_lea.vmem [#allocation14], %s451
        %p453 = pneg %p248
        %p454 = pneg %p245
        %s455 = sand.u32 %s34, 1
        %s456 = scalar_lea.sflag [#allocation15], %s455
        %s457 = sand.u32 %s235, 1
        %s458 = smul.addr %s457, 16
        %s459 = scalar_lea.vmem [#allocation16], %s458
        %v460 = vld [vmem:[#allocation8] sm:$0xff]
        %v461 = vld [vmem:[#allocation8 + $0x8] sm:$0xff]
        %v462 = vld [vmem:[%s377] sm:$0xff]
        %v463 = vld [vmem:[%s377 + $0x8] sm:$0xff]
        %vm464 = vcmask 130048
        %v466 = vsel %vm464, %v460, 0
        %v469 = vsel %vm464, %v461, 0
        %471 = vmatprep.subr.mxu0 0.0
        %472 = vmatpush1.msra.mxu0 0.0
        %473 = vmatprep.subr.mxu0 0.0
        %474 = vmatpush1.msra.mxu0 0.0
        %475 = vmatprep.subr.mxu0 0.0
        %476 = vmatpush1.msra.mxu0 0.0
        %477 = vmatprep.subr.mxu0 0.0
        %478 = vmatpush1.msra.mxu0 0.0
        %479 = vmatprep.subr.mxu0 0.0
        %480 = vmatpush1.msra.mxu0 0.0
        %481 = vmatprep.subr.mxu0 0.0
        %482 = vmatpush1.msra.mxu0 0.0
        %483 = vmatprep.subr.mxu0 0.0
        %484 = vmatpush1.msra.mxu0 0.0
        %485 = vmatprep.subr.mxu0 0.0
        %486 = vmatpush1.msra.mxu0 0.0
        %487 = vmatprep.subr.mxu0 0.0
        %488 = vmatpush1.msra.mxu0 0.0
        %489 = vmatprep.subr.mxu0 0.0
        %490 = vmatpush1.msra.mxu0 0.0
        %491 = vmatprep.subr.mxu0 0.0
        %492 = vmatpush1.msra.mxu0 0.0
        %493 = vmatprep.subr.mxu0 0.0
        %494 = vmatpush1.msra.mxu0 0.0
        %495 = vmatprep.subr.mxu0 0.0
        %496 = vmatpush1.msra.mxu0 0.0
        %497 = vmatprep.subr.mxu0 0.0
        %498 = vmatpush1.msra.mxu0 0.0
        %499 = vmatprep.subr.mxu0 0.0
        %500 = vmatpush1.msra.mxu0 %v463
        %501 = vmatprep.subr.mxu0 0.0
        %502 = vmatpush1.msra.mxu0 %v462
        %503 = vmatprep.subr.mxu0 0.0
        %504 = vmatpush2.msra.mxu0 0.0
        %505 = vmatprep.subr.mxu0 0.0
        %506 = vmatpush2.msra.mxu0 0.0
        %507 = vmatprep.subr.mxu0 0.0
        %508 = vmatpush2.msra.mxu0 0.0
        %509 = vmatprep.subr.mxu0 0.0
        %510 = vmatpush2.msra.mxu0 0.0
        %511 = vmatprep.subr.mxu0 0.0
        %512 = vmatpush2.msra.mxu0 0.0
        %513 = vmatprep.subr.mxu0 0.0
        %514 = vmatpush2.msra.mxu0 0.0
        %515 = vmatprep.subr.mxu0 0.0
        %516 = vmatpush2.msra.mxu0 0.0
        %517 = vmatprep.subr.mxu0 0.0
        %518 = vmatpush2.msra.mxu0 0.0
        %519 = vmatprep.subr.mxu0 0.0
        %520 = vmatpush2.msra.mxu0 0.0
        %521 = vmatprep.subr.mxu0 0.0
        %522 = vmatpush2.msra.mxu0 0.0
        %523 = vmatprep.subr.mxu0 0.0
        %524 = vmatpush2.msra.mxu0 0.0
        %525 = vmatprep.subr.mxu0 0.0
        %526 = vmatpush2.msra.mxu0 0.0
        %527 = vmatprep.subr.mxu0 0.0
        %528 = vmatpush2.msra.mxu0 0.0
        %529 = vmatprep.subr.mxu0 0.0
        %530 = vmatpush2.msra.mxu0 0.0
        %531 = vmatprep.subr.mxu0 0.0
        %532 = vmatpush2.msra.mxu0 0.0
        %533 = vmatprep.subr.mxu0 0.0
        %534 = vmatpush2.msra.mxu0 0.0
        %535 = vmatprep.mubr.f32.mxu0 0.0
        %536 = vmatmul.mubr.f32.gmra.mxu0 %v466
        %v537 = vpop.f32.mrf.mxu0
        %v538 = vadd.f32 0.0, %v537
        %v539 = vpop.f32.mrf.mxu0
        %540 = vmatprep.mubr.f32.mxu0 0.0
        %541 = vmatmul.mubr.f32.gmra.mxu0 %v469
        %v542 = vpop.f32.mrf.mxu0
        %v543 = vadd.f32 0.0, %v542
        %v544 = vpop.f32.mrf.mxu0
        %545 = vdwg.mxu0
        %546 = vst [vmem:[%s445] sm:$0xff] %v538
        %547 = vst [vmem:[%s445 + $0x8] sm:$0xff] %v543
        %v548 = vld [vmem:[#allocation10] sm:$0xff]
        %v549 = vld [vmem:[#allocation10 + $0x8] sm:$0xff]
        %v550 = vld [vmem:[%s386] sm:$0xff]
        %v551 = vld [vmem:[%s386 + $0x8] sm:$0xff]
        %v553 = vsel %vm464, %v548, 0
        %v556 = vsel %vm464, %v549, 0
        %558 = vmatprep.subr.mxu0 0.0
        %559 = vmatpush1.msra.mxu0 0.0
        %560 = vmatprep.subr.mxu0 0.0
        %561 = vmatpush1.msra.mxu0 0.0
        %562 = vmatprep.subr.mxu0 0.0
        %563 = vmatpush1.msra.mxu0 0.0
        %564 = vmatprep.subr.mxu0 0.0
        %565 = vmatpush1.msra.mxu0 0.0
        %566 = vmatprep.subr.mxu0 0.0
        %567 = vmatpush1.msra.mxu0 0.0
        %568 = vmatprep.subr.mxu0 0.0
        %569 = vmatpush1.msra.mxu0 0.0
        %570 = vmatprep.subr.mxu0 0.0
        %571 = vmatpush1.msra.mxu0 0.0
        %572 = vmatprep.subr.mxu0 0.0
        %573 = vmatpush1.msra.mxu0 0.0
        %574 = vmatprep.subr.mxu0 0.0
        %575 = vmatpush1.msra.mxu0 0.0
        %576 = vmatprep.subr.mxu0 0.0
        %577 = vmatpush1.msra.mxu0 0.0
        %578 = vmatprep.subr.mxu0 0.0
        %579 = vmatpush1.msra.mxu0 0.0
        %580 = vmatprep.subr.mxu0 0.0
        %581 = vmatpush1.msra.mxu0 0.0
        %582 = vmatprep.subr.mxu0 0.0
        %583 = vmatpush1.msra.mxu0 0.0
        %584 = vmatprep.subr.mxu0 0.0
        %585 = vmatpush1.msra.mxu0 0.0
        %586 = vmatprep.subr.mxu0 0.0
        %587 = vmatpush1.msra.mxu0 %v551
        %588 = vmatprep.subr.mxu0 0.0
        %589 = vmatpush1.msra.mxu0 %v550
        %590 = vmatprep.subr.mxu0 0.0
        %591 = vmatpush2.msra.mxu0 0.0
        %592 = vmatprep.subr.mxu0 0.0
        %593 = vmatpush2.msra.mxu0 0.0
        %594 = vmatprep.subr.mxu0 0.0
        %595 = vmatpush2.msra.mxu0 0.0
        %596 = vmatprep.subr.mxu0 0.0
        %597 = vmatpush2.msra.mxu0 0.0
        %598 = vmatprep.subr.mxu0 0.0
        %599 = vmatpush2.msra.mxu0 0.0
        %600 = vmatprep.subr.mxu0 0.0
        %601 = vmatpush2.msra.mxu0 0.0
        %602 = vmatprep.subr.mxu0 0.0
        %603 = vmatpush2.msra.mxu0 0.0
        %604 = vmatprep.subr.mxu0 0.0
        %605 = vmatpush2.msra.mxu0 0.0
        %606 = vmatprep.subr.mxu0 0.0
        %607 = vmatpush2.msra.mxu0 0.0
        %608 = vmatprep.subr.mxu0 0.0
        %609 = vmatpush2.msra.mxu0 0.0
        %610 = vmatprep.subr.mxu0 0.0
        %611 = vmatpush2.msra.mxu0 0.0
        %612 = vmatprep.subr.mxu0 0.0
        %613 = vmatpush2.msra.mxu0 0.0
        %614 = vmatprep.subr.mxu0 0.0
        %615 = vmatpush2.msra.mxu0 0.0
        %616 = vmatprep.subr.mxu0 0.0
        %617 = vmatpush2.msra.mxu0 0.0
        %618 = vmatprep.subr.mxu0 0.0
        %619 = vmatpush2.msra.mxu0 0.0
        %620 = vmatprep.subr.mxu0 0.0
        %621 = vmatpush2.msra.mxu0 0.0
        %622 = vmatprep.mubr.f32.mxu0 0.0
        %623 = vmatmul.mubr.f32.gmra.mxu0 %v553
        %v624 = vpop.f32.mrf.mxu0
        %v625 = vadd.f32 0.0, %v624
        %v626 = vpop.f32.mrf.mxu0
        %627 = vmatprep.mubr.f32.mxu0 0.0
        %628 = vmatmul.mubr.f32.gmra.mxu0 %v556
        %v629 = vpop.f32.mrf.mxu0
        %v630 = vadd.f32 0.0, %v629
        %v631 = vpop.f32.mrf.mxu0
        %632 = vdwg.mxu0
        %633 = vst [vmem:[%s452] sm:$0xff] %v625
        %634 = vst [vmem:[%s452 + $0x8] sm:$0xff] %v630
        %v635 = vld [vmem:[#allocation11] sm:$0xff]
        %v636 = vld [vmem:[#allocation11 + $0x8] sm:$0xff]
        %v637 = vld [vmem:[%s395] sm:$0xff]
        %v638 = vld [vmem:[%s395 + $0x8] sm:$0xff]
        %v640 = vsel %vm464, %v635, 0
        %v643 = vsel %vm464, %v636, 0
        %645 = vmatprep.subr.mxu0 0.0
        %646 = vmatpush1.msra.mxu0 0.0
        %647 = vmatprep.subr.mxu0 0.0
        %648 = vmatpush1.msra.mxu0 0.0
        %649 = vmatprep.subr.mxu0 0.0
        %650 = vmatpush1.msra.mxu0 0.0
        %651 = vmatprep.subr.mxu0 0.0
        %652 = vmatpush1.msra.mxu0 0.0
        %653 = vmatprep.subr.mxu0 0.0
        %654 = vmatpush1.msra.mxu0 0.0
        %655 = vmatprep.subr.mxu0 0.0
        %656 = vmatpush1.msra.mxu0 0.0
        %657 = vmatprep.subr.mxu0 0.0
        %658 = vmatpush1.msra.mxu0 0.0
        %659 = vmatprep.subr.mxu0 0.0
        %660 = vmatpush1.msra.mxu0 0.0
        %661 = vmatprep.subr.mxu0 0.0
        %662 = vmatpush1.msra.mxu0 0.0
        %663 = vmatprep.subr.mxu0 0.0
        %664 = vmatpush1.msra.mxu0 0.0
        %665 = vmatprep.subr.mxu0 0.0
        %666 = vmatpush1.msra.mxu0 0.0
        %667 = vmatprep.subr.mxu0 0.0
        %668 = vmatpush1.msra.mxu0 0.0
        %669 = vmatprep.subr.mxu0 0.0
        %670 = vmatpush1.msra.mxu0 0.0
        %671 = vmatprep.subr.mxu0 0.0
        %672 = vmatpush1.msra.mxu0 0.0
        %673 = vmatprep.subr.mxu0 0.0
        %674 = vmatpush1.msra.mxu0 %v638
        %675 = vmatprep.subr.mxu0 0.0
        %676 = vmatpush1.msra.mxu0 %v637
        %677 = vmatprep.subr.mxu0 0.0
        %678 = vmatpush2.msra.mxu0 0.0
        %679 = vmatprep.subr.mxu0 0.0
        %680 = vmatpush2.msra.mxu0 0.0
        %681 = vmatprep.subr.mxu0 0.0
        %682 = vmatpush2.msra.mxu0 0.0
        %683 = vmatprep.subr.mxu0 0.0
        %684 = vmatpush2.msra.mxu0 0.0
        %685 = vmatprep.subr.mxu0 0.0
        %686 = vmatpush2.msra.mxu0 0.0
        %687 = vmatprep.subr.mxu0 0.0
        %688 = vmatpush2.msra.mxu0 0.0
        %689 = vmatprep.subr.mxu0 0.0
        %690 = vmatpush2.msra.mxu0 0.0
        %691 = vmatprep.subr.mxu0 0.0
        %692 = vmatpush2.msra.mxu0 0.0
        %693 = vmatprep.subr.mxu0 0.0
        %694 = vmatpush2.msra.mxu0 0.0
        %695 = vmatprep.subr.mxu0 0.0
        %696 = vmatpush2.msra.mxu0 0.0
        %697 = vmatprep.subr.mxu0 0.0
        %698 = vmatpush2.msra.mxu0 0.0
        %699 = vmatprep.subr.mxu0 0.0
        %700 = vmatpush2.msra.mxu0 0.0
        %701 = vmatprep.subr.mxu0 0.0
        %702 = vmatpush2.msra.mxu0 0.0
        %703 = vmatprep.subr.mxu0 0.0
        %704 = vmatpush2.msra.mxu0 0.0
        %705 = vmatprep.subr.mxu0 0.0
        %706 = vmatpush2.msra.mxu0 0.0
        %707 = vmatprep.subr.mxu0 0.0
        %708 = vmatpush2.msra.mxu0 0.0
        %709 = vmatprep.mubr.f32.mxu0 0.0
        %710 = vmatmul.mubr.f32.gmra.mxu0 %v640
        %v711 = vpop.f32.mrf.mxu0
        %v712 = vadd.f32 0.0, %v711
        %v713 = vpop.f32.mrf.mxu0
        %714 = vmatprep.mubr.f32.mxu0 0.0
        %715 = vmatmul.mubr.f32.gmra.mxu0 %v643
        %v716 = vpop.f32.mrf.mxu0
        %v717 = vadd.f32 0.0, %v716
        %v718 = vpop.f32.mrf.mxu0
        %719 = vdwg.mxu0
        %720 = vst [vmem:[%s459] sm:$0xff] %v712
        %721 = vst [vmem:[%s459 + $0x8] sm:$0xff] %v717
        %s722 = sand.u32 %s183, 1
        %s723 = scalar_lea.sflag [#allocation4], %s722
        %s724 = sand.u32 %s183, 1
        %s725 = smul.addr %s724, 16
        %s726 = scalar_lea.vmem [#allocation13], %s725
        %s727 = sand.u32 %s34, 1
        %s728 = scalar_lea.sflag [#allocation15], %s727
        %s729 = sand.u32 %s209, 1
        %s730 = smul.addr %s729, 16
        %s731 = scalar_lea.vmem [#allocation14], %s730
        %s732 = sand.u32 %s34, 1
        %s733 = scalar_lea.sflag [#allocation15], %s732
        %s734 = sand.u32 %s235, 1
        %s735 = smul.addr %s734, 16
        %s736 = scalar_lea.vmem [#allocation16], %s735
        // Predicated region
        $region69: #{tpu_custom_call.1} parent=43 // pred_check
          %p737 = pneg %p193
        $region70: #{tpu_custom_call.1} parent=43 // pred_check_branch
          %739 = sbr.rel (%p737) target = $region72
        $region71: #{tpu_custom_call.1} parent=43 // pred_region
          %s741 = ssub.s32 256, 256
          %742 = vsyncadd %s723, %s741
          %s743 = smul.addr %s34, 128
          %s744 = scalar_lea.hbm %s6, %s743
          %s745 = sshll.u32 %s726, 4
          %s746 = int_to_ptr.vmem [resolvable:$true] %s745
          %751 = dma.vmem_to_hbm [thread:$0]  %s746, 256, %s744, %s723, 128, 256, 8
        $region72: #{tpu_custom_call.1} parent=43 // pred_fallthru
          _
        // Predicated region
        $region73: #{tpu_custom_call.1} parent=43 // pred_check
          %p752 = pneg %p219
        $region74: #{tpu_custom_call.1} parent=43 // pred_check_branch
          %754 = sbr.rel (%p752) target = $region76
        $region75: #{tpu_custom_call.1} parent=43 // pred_region
          %s756 = ssub.s32 256, 256
          %757 = vsyncadd %s728, %s756
          %s758 = smul.addr %s34, 128
          %s759 = scalar_lea.hbm %s7, %s758
          %s760 = sshll.u32 %s731, 4
          %s761 = int_to_ptr.vmem [resolvable:$true] %s760
          %766 = dma.vmem_to_hbm [thread:$0]  %s761, 256, %s759, %s728, 128, 256, 8
        $region76: #{tpu_custom_call.1} parent=43 // pred_fallthru
          _
        // Predicated region
        $region77: #{tpu_custom_call.1} parent=43 // pred_check
          %p767 = pneg %p245
        $region78: #{tpu_custom_call.1} parent=43 // pred_check_branch
          %769 = sbr.rel (%p767) target = $region80
        $region79: #{tpu_custom_call.1} parent=43 // pred_region
          %s771 = ssub.s32 256, 256
          %772 = vsyncadd %s733, %s771
          %s773 = smul.addr %s34, 128
          %s774 = scalar_lea.hbm %s8, %s773
          %s775 = sshll.u32 %s736, 4
          %s776 = int_to_ptr.vmem [resolvable:$true] %s775
          %781 = dma.vmem_to_hbm [thread:$0]  %s776, 256, %s774, %s733, 128, 256, 8
        $region80: #{tpu_custom_call.1} parent=43 // pred_fallthru
          _
      $region44: #{tpu_custom_call.1} parent=5 // pred_fallthru
        _
      %p782 = scmp.le.s32.totalorder 2, %s29
      // Predicated region
      $region81: #{tpu_custom_call.1} parent=5 // pred_check
        %p783 = pneg %p782
      $region82: #{tpu_custom_call.1} parent=5 // pred_check_branch
        %785 = sbr.rel (%p783) target = $region84
      $region83: #{tpu_custom_call.1} parent=5 // pred_region
        %s786 = ssub.s32 %s29, 2
        // Predicated region
        $region85: #{tpu_custom_call.1} parent=83 // pred_check
          %p787 = pneg %p199
        $region86: #{tpu_custom_call.1} parent=83 // pred_check_branch
          %789 = sbr.rel (%p787) target = $region88
        $region87: #{tpu_custom_call.1} parent=83 // pred_region
          %s790 = sand.u32 %s184, 1
          %s791 = scalar_lea.sflag [#allocation4], %s790
          %s792 = sand.u32 %s184, 1
          %s793 = smul.addr %s792, 16
          %s794 = scalar_lea.vmem [#allocation13], %s793
          %795 = dma.done %s791, 256
        $region88: #{tpu_custom_call.1} parent=83 // pred_fallthru
          _
        // Predicated region
        $region89: #{tpu_custom_call.1} parent=83 // pred_check
          %p796 = pneg %p225
        $region90: #{tpu_custom_call.1} parent=83 // pred_check_branch
          %798 = sbr.rel (%p796) target = $region92
        $region91: #{tpu_custom_call.1} parent=83 // pred_region
          %s799 = sand.u32 %s35, 1
          %s800 = scalar_lea.sflag [#allocation15], %s799
          %s801 = sand.u32 %s210, 1
          %s802 = smul.addr %s801, 16
          %s803 = scalar_lea.vmem [#allocation14], %s802
          %804 = dma.done %s800, 256
        $region92: #{tpu_custom_call.1} parent=83 // pred_fallthru
          _
        // Predicated region
        $region93: #{tpu_custom_call.1} parent=83 // pred_check
          %p805 = pneg %p251
        $region94: #{tpu_custom_call.1} parent=83 // pred_check_branch
          %807 = sbr.rel (%p805) target = $region96
        $region95: #{tpu_custom_call.1} parent=83 // pred_region
          %s808 = sand.u32 %s35, 1
          %s809 = scalar_lea.sflag [#allocation15], %s808
          %s810 = sand.u32 %s236, 1
          %s811 = smul.addr %s810, 16
          %s812 = scalar_lea.vmem [#allocation16], %s811
          %813 = dma.done %s809, 256
        $region96: #{tpu_custom_call.1} parent=83 // pred_fallthru
          _
      $region84: #{tpu_custom_call.1} parent=5 // pred_fallthru
        _
    $region6: #{tpu_custom_call.1} parent=1 // loop_footer
      %s33 = sadd.s32 1, %s29
    $region7: #{tpu_custom_call.1} parent=1 // loop_footer_branch
      %28 = sbr.rel target = $region3
    $region8: #{tpu_custom_call.1} parent=1 // loop_exit
      _
    %814 = vsyncpa [#allocation3], 1
    %s815 = scalar_lea.sflag [#allocation3], 1
    %816 = vsyncpa %s815, 1
    %817 = vsyncpa [#allocation6], 1
    %s818 = scalar_lea.sflag [#allocation6], 1
    %819 = vsyncpa %s818, 1
    %820 = vsyncpa [#allocation9], 1
    %821 = vsyncpa [#allocation12], 1
    %822 = vsyncpa [#allocation4], 1
    %s823 = scalar_lea.sflag [#allocation4], 1
    %824 = vsyncpa %s823, 1
    %825 = vsyncpa [#allocation15], 1
    %s826 = scalar_lea.sflag [#allocation15], 1
    %827 = vsyncpa %s826, 1

</llo_original>
